<compile_context>
chip_gen: v6e
topology: v6e:2x2x1
jax: 0.10.0
libtpu: 0.0.40
codegen_flags: <defaults>
</compile_context>

<pallas_src>
import functools

import jax
import jax.numpy as jnp
from jax.experimental import pallas as pl
from jax.experimental.pallas import tpu as pltpu


# op -> (real_plane_fn, imag_plane_fn) applied to v, where x1 = 0 + i*v.
# None means that plane of op(x1) is structurally zero: never computed/stored.
_COMPLEX_OPS = {
    "abs":        (lambda v: jnp.abs(v), None),                  # |i*v| = |v|
    "exp":        (lambda v: jnp.cos(v), lambda v: jnp.sin(v)),  # exp(i*v)
    "conj":       (None, lambda v: -v),                          # conj(i*v) = -i*v
    "neg":        (None, lambda v: -v),
    "reciprocal": (None, lambda v: -1.0 / v),                    # 1/(i*v) = -i/v
}


def _choose_layout(n):
    """Lane-dense 2D view (rows, cols, pad) of a flat length-n array."""
    for cols in (2048, 1024, 512, 256, 128):
        if n % cols == 0 and n // cols >= 8:
            return n // cols, cols, 0
    for cols in (2048, 1024, 512, 256, 128):
        if n % cols == 0:
            return n // cols, cols, 0
    # Rare fallback (n not a multiple of 128): pad the flat array.
    cols = 128
    padded = pl.cdiv(n, cols) * cols
    return padded // cols, cols, padded - n


def _plane_kernel(x_ref, *out_refs, plane_fns, compute_dtype):
    # One lane-dense elementwise pass: cast once, emit each requested plane.
    v = x_ref[...].astype(compute_dtype)
    for fn, o_ref in zip(plane_fns, out_refs):
        o_ref[...] = fn(v).astype(o_ref.dtype)


def unary_op_complex_net(x, op="abs", dtype=jnp.float32):
    """Returns (view_as_real(op(x.astype(dtype)*1j).astype(c64)), view_as_real(x.astype(dtype)*1j))."""
    if op not in _COMPLEX_OPS:
        raise NotImplementedError(f"op {op!r} not supported")
    re_fn, im_fn = _COMPLEX_OPS[op]
    dtype = jnp.dtype(dtype)
    need_cast = dtype != jnp.dtype(x.dtype)

    # Planes the kernel must actually produce (skip structural zeros; skip the
    # x1 imag plane when the cast is a no-op — it is just `x`).
    plane_fns, plane_dtypes = [], []
    if re_fn is not None:
        plane_fns.append(re_fn); plane_dtypes.append(jnp.float32)
    if im_fn is not None:
        plane_fns.append(im_fn); plane_dtypes.append(jnp.float32)
    if need_cast:
        plane_fns.append(lambda v: v); plane_dtypes.append(dtype)

    orig_shape = x.shape
    n = x.size
    rows, cols, pad = _choose_layout(n)
    x_flat = x.reshape(-1)
    if pad:  # rare fallback only; common shapes take the no-copy path
        x_flat = jnp.pad(x_flat, (0, pad))
    x2d = x_flat.reshape(rows, cols)

    # Block sizing: ~MiB-scale lane-dense tiles; double-buffered input+outputs
    # kept under ~12 MiB so default scoped VMEM is fine on v5e/v6e/v7x.
    n_out = len(plane_fns)
    vmem_budget = 12 * 1024 * 1024
    tile_rows = max(8, vmem_budget // (2 * (1 + n_out) * cols * 4))
    tile_rows = min(rows, tile_rows)
    if tile_rows < rows:
        tile_rows = max(8, (tile_rows // 8) * 8)  # keep sublane dim a multiple of 8
    grid = (pl.cdiv(rows, tile_rows),)            # ragged last block handled by Pallas
    block = (tile_rows, cols)

    kernel = functools.partial(_plane_kernel, plane_fns=tuple(plane_fns),
                               compute_dtype=dtype)
    planes = pl.pallas_call(
        kernel,
        out_shape=tuple(jax.ShapeDtypeStruct((rows, cols), dt) for dt in plane_dtypes),
        grid=grid,
        in_specs=[pl.BlockSpec(block, lambda i: (i, 0))],
        out_specs=tuple(pl.BlockSpec(block, lambda i: (i, 0)) for _ in plane_fns),
        compiler_params=pltpu.CompilerParams(dimension_semantics=("parallel",)),
    )(x2d)
    if not isinstance(planes, (tuple, list)):
        planes = (planes,)

    def unflatten(p2d):
        flat = p2d.reshape(-1)
        if pad:
            flat = flat[:n]
        return flat.reshape(orig_shape)

    it = iter(planes)
    y_re = unflatten(next(it)) if re_fn is not None else None
    y_im = unflatten(next(it)) if im_fn is not None else None
    v = unflatten(next(it)) if need_cast else x   # x1 = i*v; no cast -> v is x itself

    f32_zero = jnp.zeros(orig_shape, jnp.float32)
    y = jnp.stack([y_re if y_re is not None else f32_zero,
                   y_im if y_im is not None else f32_zero], axis=-1)
    x1_view = jnp.stack([jnp.zeros(orig_shape, dtype), v.astype(dtype)], axis=-1)
    return y, x1_view


if __name__ == "__main__":
    key = jax.random.PRNGKey(0)
    x = jax.random.normal(key, (2, 4, 16, 16), dtype=jnp.float32)
    target_dtype = jnp.float32  # mirrors the module's `dtype` ctor arg

    # Pure-JAX reference following the torch graph literally.
    v = x.astype(target_dtype)
    x1_c = jax.lax.complex(jnp.zeros_like(v), v)        # x.to(dtype) * 1j
    x1_ref = jnp.stack([jnp.real(x1_c), jnp.imag(x1_c)], axis=-1)

    # op = torch.abs
    y, x1v = unary_op_complex_net(x, op="abs", dtype=target_dtype)
    jax.block_until_ready((y, x1v))
    y_c = jnp.abs(x1_c).astype(jnp.complex64)           # op(x1).to(complex64)
    y_ref = jnp.stack([jnp.real(y_c), jnp.imag(y_c)], axis=-1)
    assert y.shape == x.shape + (2,) and x1v.shape == x.shape + (2,)
    assert y.dtype == jnp.float32 and x1v.dtype == target_dtype
    assert jnp.allclose(y, y_ref, atol=1e-6, rtol=1e-6)
    assert jnp.allclose(x1v, x1_ref, atol=1e-6, rtol=1e-6)

    # op = torch.exp (exercises a genuinely complex-valued result).
    y2, x1v2 = unary_op_complex_net(x, op="exp", dtype=target_dtype)
    jax.block_until_ready((y2, x1v2))
    y2_c = jnp.exp(x1_c).astype(jnp.complex64)
    y2_ref = jnp.stack([jnp.real(y2_c), jnp.imag(y2_c)], axis=-1)
    assert jnp.allclose(y2, y2_ref, atol=1e-5, rtol=1e-5)
    assert jnp.allclose(x1v2, x1_ref, atol=1e-6, rtol=1e-6)

    print("KERNEL_OK")
</pallas_src>

<mosaic_0001>
module attributes {stable_mosaic.version = 11 : i64} {
  func.func @_plane_kernel(%arg0: i32, %arg1: memref<8x256xf32, #tpu.memory_space<vmem>>, %arg2: memref<8x256xf32, #tpu.memory_space<vmem>>) attributes {dimension_semantics = [#tpu.dimension_semantics<parallel>], iteration_bounds = array<i64: 1>, scalar_prefetch = 0 : i64, scratch_operands = 0 : i64, tpu.core_type = #tpu.core_type<tc>, window_params = [{transform_indices = @transform_0, window_bounds = array<i64: 8, 256>}, {transform_indices = @transform_1, window_bounds = array<i64: 8, 256>}]} {
    %c0 = arith.constant 0 : index
    %c0_0 = arith.constant 0 : index
    %0 = vector.load %arg1[%c0, %c0_0] : memref<8x256xf32, #tpu.memory_space<vmem>>, vector<8x256xf32>
    %1 = math.absf %0 : vector<8x256xf32>
    %c0_1 = arith.constant 0 : index
    %c0_2 = arith.constant 0 : index
    %2 = vector.load %arg2[%c0_1, %c0_2] : memref<8x256xf32, #tpu.memory_space<vmem>>, vector<8x256xf32>
    tpu.vector_store %arg2[%c0_1, %c0_2], %1 {strides = array<i32>} : memref<8x256xf32, #tpu.memory_space<vmem>>, vector<8x256xf32>,
    return
  }
  func.func @transform_0(%arg0: i32) -> (i32, i32) {
    %c0_i32 = arith.constant 0 : i32
    %c0_i32_0 = arith.constant 0 : i32
    return %arg0, %c0_i32 : i32, i32
  }
  func.func @transform_1(%arg0: i32) -> (i32, i32) {
    %c0_i32 = arith.constant 0 : i32
    %c0_i32_0 = arith.constant 0 : i32
    return %arg0, %c0_i32 : i32, i32
  }
}

</mosaic_0001>

<llo_original>
// kernel: tpu_custom_call.1
$region0: #{tpu_custom_call.1}
  #allocation0 [shape = 'u32[]', space=smem, size = 0x4, offset = 0x4, fixed_abs, tag = 'smem constant byte address 0x4 - core index']
  #allocation1 [shape = 'u32[144,128]{1,0:T(1,128)}', space=vmem, size = 0x12000, scoped, tag = 'internal scratch']
  %s0 = inlined_call_operand.hbm [shape: f32[8,256], index: 0, kind: input, shape index: {}]
  %s1 = inlined_call_operand.hbm [shape: f32[8,256], index: 1, kind: output, shape index: {}]
  %s2 = sld [smem:[#allocation0]]
  $region18: #{tpu_custom_call.1} parent=0
    _
  %s4 = ssub.s32 1, %s2
  %s5 = scalar_select 0, %s4, %s2
  $region1: #{tpu_custom_call.1} parent=0
    #allocation2 [shape = 'u8[8192]{0}', space=vmem, size = 0x2000, scoped, tag = 'input window, operand 0, single buffered']
    #allocation3 [shape = 's32[1]{0}', space=sflag, size = 0x4, scoped, tag = 'scoped memory for tpu_custom_call.1']
    #allocation4 [shape = 's32[1]{0}', space=sflag, size = 0x4, scoped, tag = 'scoped memory for tpu_custom_call.1']
    #allocation5 [shape = 'u8[8192]{0}', space=vmem, size = 0x2000, scoped, tag = 'output window, operand 0, single buffered']
    %6 = vsyncpa [#allocation3], 0
    %7 = vsyncpa [#allocation4], 0
    // Predicated region
    $region2: #{tpu_custom_call.1} parent=1 // pred_check
      _
    $region3: #{tpu_custom_call.1} parent=1 // pred_check_branch
      %9 = sbr.rel (0) target = $region5
    $region4: #{tpu_custom_call.1} parent=1 // pred_region
      %s11 = ssub.s32 256, 256
      %12 = vsyncadd [#allocation3], %s11
      %s14 = sshll.u32 [#allocation2], 4
      %s15 = int_to_ptr.vmem [resolvable:$true] %s14
      %17 = dma.hbm_to_vmem [thread:$0]  %s0, 256, %s15, [#allocation3]
    $region5: #{tpu_custom_call.1} parent=1 // pred_fallthru
      _
    // Predicated region
    $region6: #{tpu_custom_call.1} parent=1 // pred_check
      _
    $region7: #{tpu_custom_call.1} parent=1 // pred_check_branch
      %19 = sbr.rel (0) target = $region9
    $region8: #{tpu_custom_call.1} parent=1 // pred_region
      %20 = dma.done [#allocation3], 256
    $region9: #{tpu_custom_call.1} parent=1 // pred_fallthru
      _
    %v21 = vld [vmem:[#allocation2] sm:$0xff]
    %v22 = vld [vmem:[#allocation2 + $0x8] sm:$0xff]
    %v23 = vand.u32 2147483647, %v21
    %v24 = vand.u32 2147483647, %v22
    %25 = vst [vmem:[#allocation5] sm:$0xff] %v23
    %26 = vst [vmem:[#allocation5 + $0x8] sm:$0xff] %v24
    // Predicated region
    $region10: #{tpu_custom_call.1} parent=1 // pred_check
      _
    $region11: #{tpu_custom_call.1} parent=1 // pred_check_branch
      %28 = sbr.rel (0) target = $region13
    $region12: #{tpu_custom_call.1} parent=1 // pred_region
      %s30 = ssub.s32 256, 256
      %31 = vsyncadd [#allocation4], %s30
      %s33 = sshll.u32 [#allocation5], 4
      %s34 = int_to_ptr.vmem [resolvable:$true] %s33
      %36 = dma.vmem_to_hbm [thread:$0]  %s34, 256, %s1, [#allocation4]
    $region13: #{tpu_custom_call.1} parent=1 // pred_fallthru
      _
    // Predicated region
    $region14: #{tpu_custom_call.1} parent=1 // pred_check
      _
    $region15: #{tpu_custom_call.1} parent=1 // pred_check_branch
      %38 = sbr.rel (0) target = $region17
    $region16: #{tpu_custom_call.1} parent=1 // pred_region
      %39 = dma.done [#allocation4], 256
    $region17: #{tpu_custom_call.1} parent=1 // pred_fallthru
      _
    %40 = vsyncpa [#allocation3], 1
    %41 = vsyncpa [#allocation4], 1

</llo_original>
